<compile_context>
chip_gen: v5e
topology: v5e:2x2
jax: 0.10.0
libtpu: 0.0.40
codegen_flags: <defaults>
</compile_context>

<pallas_src>
import functools

import jax
import jax.numpy as jnp
from jax.experimental import pallas as pl
from jax.experimental.pallas import tpu as pltpu


def _round_up(v, m):
    return ((v + m - 1) // m) * m


def _vmem_capacity_bytes():
    """Physical VMEM per TensorCore; conservative 64 MiB (v7x) fallback."""
    try:
        info = pltpu.get_tpu_info()
        cap = getattr(info, "vmem_capacity_bytes", None)
        if cap:
            return int(cap)
    except Exception:
        pass
    return 64 << 20


def _num_tensorcores():
    """TensorCores per chip (1 on v5e/v6e, 2 on v7x); defaults to 1."""
    try:
        info = pltpu.get_tpu_info()
        for attr in ("num_cores", "core_count", "num_tensor_cores",
                     "tensorcores_per_chip"):
            v = getattr(info, attr, None)
            if v and int(v) >= 1:
                return int(v)
    except Exception:
        pass
    try:
        if "v7" in jax.devices()[0].device_kind.lower():
            return 2
    except Exception:
        pass
    return 1


def _deepsad_loss_kernel(x_ref, c_ref, w_ref, st_ref, o_ref, *,
                         eta, eps, batch_rows, group, tile_rows,
                         tiles_per_core, approx_reciprocal):
    core = pl.program_id(0)   # "parallel" axis (TensorCore shard on v7x)
    step = pl.program_id(1)   # "arbitrary" batch-reduction axis

    @pl.when(step == 0)
    def _():
        o_ref[0, 0] = jnp.float32(0.0)

    x = x_ref[...].astype(jnp.float32)       # (TB, gD) -- f32 compute
    ctr = c_ref[...]                          # (1, gD) f32, broadcasts over rows
    st = st_ref[...]                          # (TB, g) int32 in {-1, 0, 1}

    diff = ctr - x
    sq = diff * diff
    # Row reduction on the MXU instead of the VPU/XLU.  w is a 0/1
    # block-diagonal matrix, so HIGHEST precision keeps this exact in f32.
    d2 = jnp.dot(sq, w_ref[...],
                 preferred_element_type=jnp.float32,
                 precision=jax.lax.Precision.HIGHEST)[:, :group]   # (TB, g)

    # losses = where(st==0, d2, eta*(d2+eps)**st), st in {-1,0,1}, folded to
    # 2 compares / 3 selects / 1 mul / 1 EUP reciprocal.
    known = st != 0
    base = d2 + jnp.where(known, jnp.float32(eps), jnp.float32(0.0))
    inv = pl.reciprocal(base, approx=approx_reciprocal)            # EUP slot
    sel = jnp.where(st < 0, inv, base)
    losses = jnp.where(known, jnp.float32(eta), jnp.float32(1.0)) * sel

    # Ragged last tile / clamped overshoot tiles: garbage rows may be
    # non-finite, so keep the mask a select (NOT a multiply), and only pay for
    # it on tiles that actually straddle the end of the batch.
    row0 = (core * tiles_per_core + step) * tile_rows
    straddles = row0 + tile_rows > batch_rows

    @pl.when(straddles)
    def _():
        rows = row0 + jax.lax.broadcasted_iota(jnp.int32, losses.shape, 0)
        o_ref[0, 0] += jnp.sum(
            jnp.where(rows < batch_rows, losses, jnp.float32(0.0)))

    @pl.when(jnp.logical_not(straddles))
    def _():
        o_ref[0, 0] += jnp.sum(losses)


def deepsad_loss(x, c, semi_target, *, eta, eps=1e-6,
                 approx_reciprocal=True, max_rows_per_tile=None,
                 vmem_fraction=0.6):
    """Pallas DeepSAD loss.

    x:            (B, D) float32 or bfloat16 (ingested in native dtype)
    c:            (D,)   hypersphere center
    semi_target:  (B,)   int in {-1, 0, 1}
    returns scalar float32 loss (mean of per-sample DeepSAD losses)
    """
    B, D = x.shape
    assert c.shape == (D,)
    assert semi_target.shape == (B,)

    # ---- lane densification for small D ------------------------------------
    if D < 128 and 128 % D == 0 and B % (128 // D) == 0:
        g = 128 // D
    else:
        g = 1
        # TODO(synk): for D < 128 with B not divisible by 128//D, pad the batch
        # (cheap) to keep the lane fold; left un-padded here for simplicity.
    batch_rows = B // g
    gD = g * D

    x2d = x.reshape(batch_rows, gD)
    st2d = semi_target.reshape(batch_rows, g).astype(jnp.int32)
    c_fold = jnp.tile(c.astype(jnp.float32).reshape(1, D), (1, g))   # (1, gD)

    # 0/1 block-diagonal reduction matrix: column j sums lanes [j*D, (j+1)*D).
    gcols = max(g, 8)   # keep the MXU output at least 8 lanes wide
    lane_group = jnp.arange(gD, dtype=jnp.int32) // D
    w = (lane_group[:, None] == jnp.arange(gcols, dtype=jnp.int32)[None, :]
         ).astype(jnp.float32)                                       # (gD, gcols)

    # ---- VMEM-budgeted tile sizing (padded shapes, per TPU generation) -----
    x_itemsize = jnp.dtype(x.dtype).itemsize
    padded_gd = _round_up(gD, 128)
    sublane = 32   # covers row packing for f32 (8) / bf16 (16) / int8 (32)

    vmem_cap = _vmem_capacity_bytes()
    vmem_limit = int(min(max(int(vmem_cap * vmem_fraction), 32 << 20), 64 << 20))

    n_wide = 3 + (1 if x_itemsize < 4 else 0)   # diff, sq, margin (+ upcast)
    per_row_bytes = (
        2 * padded_gd * x_itemsize        # x block, double buffered
        + 2 * 128 * 4                     # semi_target block (lane-pads to 128), x2
        + n_wide * padded_gd * 4          # full-width f32 temporaries
        + 12 * 128 * 4)                   # (rows, <=128-lane) f32/i32 temporaries
    budget = max(vmem_limit - (2 << 20), 4 << 20)   # slack for c / w / internals
    tile_rows = int((budget // per_row_bytes) // sublane * sublane)
    tile_rows = max(sublane, tile_rows)
    if max_rows_per_tile is not None:
        tile_rows = min(tile_rows,
                        max(sublane, (int(max_rows_per_tile) // sublane) * sublane))
    if tile_rows >= batch_rows:
        tile_rows = batch_rows            # single full-extent block (always legal)

    n_row_tiles = pl.cdiv(batch_rows, tile_rows)
    n_parallel = 2 if (_num_tensorcores() >= 2 and n_row_tiles >= 2) else 1
    tiles_per_core = pl.cdiv(n_row_tiles, n_parallel)

    def _row_block(core, step):
        # Coverage may overshoot n_row_tiles by up to n_parallel-1 tiles; clamp
        # so the auto-DMA stays in bounds (overshoot rows are masked to zero).
        return jnp.minimum(core * tiles_per_core + step, n_row_tiles - 1)

    kernel = functools.partial(
        _deepsad_loss_kernel, eta=float(eta), eps=float(eps),
        batch_rows=batch_rows, group=g, tile_rows=tile_rows,
        tiles_per_core=tiles_per_core, approx_reciprocal=approx_reciprocal)

    cost = pl.CostEstimate(
        flops=int(3 * B * D + 8 * B),
        transcendentals=int(B),
        bytes_accessed=int(B * D * x_itemsize + B * 4 + gD * 4
                           + gD * gcols * 4 + n_parallel * 4))

    # TODO(synk): if D ever gets so large that one (tile_rows, gD) block cannot
    # fit the VMEM budget, add a grid axis over D with per-row partial sums.
    partials = pl.pallas_call(
        kernel,
        out_shape=jax.ShapeDtypeStruct((n_parallel, 1), jnp.float32),
        grid=(n_parallel, tiles_per_core),
        in_specs=[
            pl.BlockSpec((tile_rows, gD),
                         lambda core, step: (_row_block(core, step), 0)),
            pl.BlockSpec((1, gD), lambda core, step: (0, 0)),
            pl.BlockSpec((gD, gcols), lambda core, step: (0, 0)),
            pl.BlockSpec((tile_rows, g),
                         lambda core, step: (_row_block(core, step), 0)),
        ],
        out_specs=pl.BlockSpec((1, 1), lambda core, step: (core, 0),
                               memory_space=pltpu.SMEM),
        compiler_params=pltpu.CompilerParams(
            dimension_semantics=("parallel", "arbitrary"),
            vmem_limit_bytes=vmem_limit),
        cost_estimate=cost,
    )(x2d, c_fold, w, st2d)

    # TODO(synk): each core's partial is a long sequential f32 sum; switch to a
    # short VMEM vector accumulator if bit-level parity at very large B matters.
    return jnp.sum(partials) / jnp.float32(B)


def deepsad_loss_ref(x, c, semi_target, *, eta, eps=1e-6):
    """Pure-JAX reference mirroring the PyTorch forward."""
    xf = x.astype(jnp.float32)
    dist = jnp.linalg.norm(c[None, :].astype(jnp.float32) - xf, axis=1)
    d2 = dist ** 2
    tf = semi_target.astype(jnp.float32)
    losses = jnp.where(semi_target == 0, d2, eta * (d2 + eps) ** tf)
    return jnp.mean(losses)


if __name__ == "__main__":
    key = jax.random.PRNGKey(0)
    kx, kc, kt, kx2, kt2, kx3, kt3 = jax.random.split(key, 7)

    eta, eps = 1.5, 1e-6
    # approx reciprocal + MXU reduce -> compare at ~3e-3.
    TOL = dict(rtol=3e-3, atol=3e-3)

    # --- small f32 case exercising the D<128 lane fold (g=4), single tile ---
    B, D = 8, 32
    x = jax.random.normal(kx, (B, D), dtype=jnp.float32)
    c = jax.random.normal(kc, (D,), dtype=jnp.float32)
    st = jax.random.randint(kt, (B,), minval=-1, maxval=2, dtype=jnp.int32)

    loss = jax.block_until_ready(deepsad_loss(x, c, st, eta=eta, eps=eps))
    ref = jax.block_until_ready(deepsad_loss_ref(x, c, st, eta=eta, eps=eps))
    assert jnp.allclose(loss, ref, **TOL), (loss, ref)

    # --- native bf16 ingestion (upcast to f32 inside the kernel) ------------
    x_bf16 = x.astype(jnp.bfloat16)
    loss_bf = jax.block_until_ready(deepsad_loss(x_bf16, c, st, eta=eta, eps=eps))
    ref_bf = jax.block_until_ready(
        deepsad_loss_ref(x_bf16.astype(jnp.float32), c, st, eta=eta, eps=eps))
    assert jnp.allclose(loss_bf, ref_bf, **TOL), (loss_bf, ref_bf)

    # --- ragged multi-tile case (D=128, g=1): pipelining, parallel axis,
    #     masked partial tile and (on 2-core chips) clamped overshoot tile ----
    B2, D2 = 33, 128
    x2 = jax.random.normal(kx2, (B2, D2), dtype=jnp.float32)
    c2 = jax.random.normal(kc, (D2,), dtype=jnp.float32)
    st2 = jax.random.randint(kt2, (B2,), minval=-1, maxval=2, dtype=jnp.int32)
    loss2 = jax.block_until_ready(
        deepsad_loss(x2, c2, st2, eta=eta, eps=eps, max_rows_per_tile=32))
    ref2 = jax.block_until_ready(deepsad_loss_ref(x2, c2, st2, eta=eta, eps=eps))
    assert jnp.allclose(loss2, ref2, **TOL), (loss2, ref2)

    # --- multi-tile case with the lane fold engaged (D=32 -> g=4) -----------
    B3, D3 = 256, 32
    x3 = jax.random.normal(kx3, (B3, D3), dtype=jnp.float32)
    c3 = jax.random.normal(kc, (D3,), dtype=jnp.float32)
    st3 = jax.random.randint(kt3, (B3,), minval=-1, maxval=2, dtype=jnp.int32)
    loss3 = jax.block_until_ready(
        deepsad_loss(x3, c3, st3, eta=eta, eps=eps, max_rows_per_tile=32))
    ref3 = jax.block_until_ready(deepsad_loss_ref(x3, c3, st3, eta=eta, eps=eps))
    assert jnp.allclose(loss3, ref3, **TOL), (loss3, ref3)

    print("KERNEL_OK")
</pallas_src>

<mosaic_0001>
module attributes {stable_mosaic.version = 11 : i64} {
  func.func @_deepsad_loss_kernel(%arg0: i32, %arg1: i32, %arg2: memref<2x128xf32, #tpu.memory_space<vmem>>, %arg3: memref<1x128xf32, #tpu.memory_space<vmem>>, %arg4: memref<128x8xf32, #tpu.memory_space<vmem>>, %arg5: memref<2x4xi32, #tpu.memory_space<vmem>>, %arg6: memref<1x1xf32, #tpu.memory_space<smem>>) attributes {dimension_semantics = [#tpu.dimension_semantics<parallel>, #tpu.dimension_semantics<arbitrary>], iteration_bounds = array<i64: 1, 1>, scalar_prefetch = 0 : i64, scratch_operands = 0 : i64, tpu.core_type = #tpu.core_type<tc>, window_params = [{transform_indices = @transform_0, window_bounds = array<i64: 2, 128>}, {pipeline_mode = #tpu.pipeline_mode<synchronous>, transform_indices = @transform_1, window_bounds = array<i64: 1, 128>}, {pipeline_mode = #tpu.pipeline_mode<synchronous>, transform_indices = @transform_2, window_bounds = array<i64: 128, 8>}, {transform_indices = @transform_3, window_bounds = array<i64: 2, 4>}, {transform_indices = @transform_4, window_bounds = array<i64: 1, 1>}]} {
    %c0_i32 = arith.constant 0 : i32
    %0 = arith.cmpi eq, %arg1, %c0_i32 : i32
    %1 = arith.extui %0 : i1 to i32
    %c0_i32_0 = arith.constant 0 : i32
    %2 = arith.cmpi ne, %1, %c0_i32_0 : i32
    scf.if %2 {
      %cst_18 = arith.constant 0.000000e+00 : f32
      %c0_19 = arith.constant 0 : index
      %c0_20 = arith.constant 0 : index
      %36 = memref.load %arg6[%c0_19, %c0_20] : memref<1x1xf32, #tpu.memory_space<smem>>
      memref.store %cst_18, %arg6[%c0_19, %c0_20] : memref<1x1xf32, #tpu.memory_space<smem>>
    } else {
    }
    %c0 = arith.constant 0 : index
    %c0_1 = arith.constant 0 : index
    %3 = vector.load %arg2[%c0, %c0_1] : memref<2x128xf32, #tpu.memory_space<vmem>>, vector<2x128xf32>
    %c0_2 = arith.constant 0 : index
    %c0_3 = arith.constant 0 : index
    %4 = vector.load %arg3[%c0_2, %c0_3] : memref<1x128xf32, #tpu.memory_space<vmem>>, vector<1x128xf32>
    %c0_4 = arith.constant 0 : index
    %c0_5 = arith.constant 0 : index
    %5 = vector.load %arg5[%c0_4, %c0_5] : memref<2x4xi32, #tpu.memory_space<vmem>>, vector<2x4xi32>
    %6 = vector.broadcast %4 : vector<1x128xf32> to vector<2x128xf32>
    %7 = arith.subf %6, %3 : vector<2x128xf32>
    %8 = arith.mulf %7, %7 : vector<2x128xf32>
    %c0_6 = arith.constant 0 : index
    %c0_7 = arith.constant 0 : index
    %9 = vector.load %arg4[%c0_6, %c0_7] : memref<128x8xf32, #tpu.memory_space<vmem>>, vector<128x8xf32>
    %cst = arith.constant dense<0.000000e+00> : vector<2x8xf32>
    %10 = tpu.matmul %8, %9, %cst {dimension_numbers = #tpu.dot_dimension_numbers<[1], [0], [0], [1], [0, 0, 1, 1], [], []>, precision = #tpu.contract_precision<fp32>} : vector<2x128xf32>, vector<128x8xf32>, vector<2x8xf32> -> vector<2x8xf32>
    %11 = vector.extract_strided_slice %10 {offsets = [0, 0], sizes = [2, 4], strides = [1, 1]} : vector<2x8xf32> to vector<2x4xf32>
    %c0_i32_8 = arith.constant 0 : i32
    %12 = vector.broadcast %c0_i32_8 : i32 to vector<2x4xi32>
    %13 = arith.cmpi ne, %5, %12 : vector<2x4xi32>
    %cst_9 = arith.constant 9.99999997E-7 : f32
    %cst_10 = arith.constant 0.000000e+00 : f32
    %14 = vector.broadcast %cst_9 : f32 to vector<2x4xf32>
    %15 = vector.broadcast %cst_10 : f32 to vector<2x4xf32>
    %16 = arith.select %13, %14, %15 : vector<2x4xi1>, vector<2x4xf32>
    %17 = arith.addf %11, %16 : vector<2x4xf32>
    %18 = tpu.reciprocal %17 {approx = true} : vector<2x4xf32> -> vector<2x4xf32>
    %c0_i32_11 = arith.constant 0 : i32
    %19 = vector.broadcast %c0_i32_11 : i32 to vector<2x4xi32>
    %20 = arith.cmpi slt, %5, %19 : vector<2x4xi32>
    %21 = arith.select %20, %18, %17 : vector<2x4xi1>, vector<2x4xf32>
    %cst_12 = arith.constant 1.500000e+00 : f32
    %cst_13 = arith.constant 1.000000e+00 : f32
    %22 = vector.broadcast %cst_12 : f32 to vector<2x4xf32>
    %23 = vector.broadcast %cst_13 : f32 to vector<2x4xf32>
    %24 = arith.select %13, %22, %23 : vector<2x4xi1>, vector<2x4xf32>
    %25 = arith.mulf %24, %21 : vector<2x4xf32>
    %c1_i32 = arith.constant 1 : i32
    %26 = arith.muli %arg0, %c1_i32 : i32
    %27 = arith.addi %26, %arg1 : i32
    %c2_i32 = arith.constant 2 : i32
    %28 = arith.muli %27, %c2_i32 : i32
    %c2_i32_14 = arith.constant 2 : i32
    %29 = arith.addi %28, %c2_i32_14 : i32
    %c2_i32_15 = arith.constant 2 : i32
    %30 = arith.cmpi sgt, %29, %c2_i32_15 : i32
    %31 = arith.extui %30 : i1 to i32
    %c0_i32_16 = arith.constant 0 : i32
    %32 = arith.cmpi ne, %31, %c0_i32_16 : i32
    scf.if %32 {
      %36 = tpu.iota {dimensions = array<i32: 0>} : vector<2x4xi32>
      %37 = vector.broadcast %28 : i32 to vector<2x4xi32>
      %38 = arith.addi %37, %36 : vector<2x4xi32>
      %c0_18 = arith.constant 0 : index
      %c0_19 = arith.constant 0 : index
      %39 = memref.load %arg6[%c0_18, %c0_19] : memref<1x1xf32, #tpu.memory_space<smem>>
      %c2_i32_20 = arith.constant 2 : i32
      %40 = vector.broadcast %c2_i32_20 : i32 to vector<2x4xi32>
      %41 = arith.cmpi slt, %38, %40 : vector<2x4xi32>
      %cst_21 = arith.constant 0.000000e+00 : f32
      %42 = vector.broadcast %cst_21 : f32 to vector<2x4xf32>
      %43 = arith.select %41, %25, %42 : vector<2x4xi1>, vector<2x4xf32>
      %44 = vector.shape_cast %43 : vector<2x4xf32> to vector<1x2x4xf32>
      %cst_22 = arith.constant dense<0.000000e+00> : vector<1xf32>
      %45 = vector.multi_reduction <add>, %44, %cst_22 [1, 2] : vector<1x2x4xf32> to vector<1xf32>
      %46 = vector.shape_cast %45 : vector<1xf32> to vector<1x1x1xf32>
      %47 = vector.extract %46[0, 0, 0] : f32 from vector<1x1x1xf32>
      %48 = arith.addf %39, %47 : f32
      %c0_23 = arith.constant 0 : index
      %c0_24 = arith.constant 0 : index
      %49 = memref.load %arg6[%c0_23, %c0_24] : memref<1x1xf32, #tpu.memory_space<smem>>
      memref.store %48, %arg6[%c0_23, %c0_24] : memref<1x1xf32, #tpu.memory_space<smem>>
    } else {
    }
    %true = arith.constant true
    %33 = arith.xori %30, %true : i1
    %34 = arith.extui %33 : i1 to i32
    %c0_i32_17 = arith.constant 0 : i32
    %35 = arith.cmpi ne, %34, %c0_i32_17 : i32
    scf.if %35 {
      %c0_18 = arith.constant 0 : index
      %c0_19 = arith.constant 0 : index
      %36 = memref.load %arg6[%c0_18, %c0_19] : memref<1x1xf32, #tpu.memory_space<smem>>
      %37 = vector.shape_cast %25 : vector<2x4xf32> to vector<1x2x4xf32>
      %cst_20 = arith.constant dense<0.000000e+00> : vector<1xf32>
      %38 = vector.multi_reduction <add>, %37, %cst_20 [1, 2] : vector<1x2x4xf32> to vector<1xf32>
      %39 = vector.shape_cast %38 : vector<1xf32> to vector<1x1x1xf32>
      %40 = vector.extract %39[0, 0, 0] : f32 from vector<1x1x1xf32>
      %41 = arith.addf %36, %40 : f32
      %c0_21 = arith.constant 0 : index
      %c0_22 = arith.constant 0 : index
      %42 = memref.load %arg6[%c0_21, %c0_22] : memref<1x1xf32, #tpu.memory_space<smem>>
      memref.store %41, %arg6[%c0_21, %c0_22] : memref<1x1xf32, #tpu.memory_space<smem>>
    } else {
    }
    return
  }
  func.func @transform_0(%arg0: i32, %arg1: i32) -> (i32, i32) {
    %c1_i32 = arith.constant 1 : i32
    %0 = arith.muli %arg0, %c1_i32 : i32
    %1 = arith.addi %0, %arg1 : i32
    %c0_i32 = arith.constant 0 : i32
    %2 = arith.minsi %1, %c0_i32 : i32
    %c0_i32_0 = arith.constant 0 : i32
    %c0_i32_1 = arith.constant 0 : i32
    return %2, %c0_i32_0 : i32, i32
  }
  func.func @transform_1(%arg0: i32, %arg1: i32) -> (i32, i32) {
    %c0_i32 = arith.constant 0 : i32
    %c0_i32_0 = arith.constant 0 : i32
    %c0_i32_1 = arith.constant 0 : i32
    return %c0_i32, %c0_i32_0 : i32, i32
  }
  func.func @transform_2(%arg0: i32, %arg1: i32) -> (i32, i32) {
    %c0_i32 = arith.constant 0 : i32
    %c0_i32_0 = arith.constant 0 : i32
    %c0_i32_1 = arith.constant 0 : i32
    return %c0_i32, %c0_i32_0 : i32, i32
  }
  func.func @transform_3(%arg0: i32, %arg1: i32) -> (i32, i32) {
    %c1_i32 = arith.constant 1 : i32
    %0 = arith.muli %arg0, %c1_i32 : i32
    %1 = arith.addi %0, %arg1 : i32
    %c0_i32 = arith.constant 0 : i32
    %2 = arith.minsi %1, %c0_i32 : i32
    %c0_i32_0 = arith.constant 0 : i32
    %c0_i32_1 = arith.constant 0 : i32
    return %2, %c0_i32_0 : i32, i32
  }
  func.func @transform_4(%arg0: i32, %arg1: i32) -> (i32, i32) {
    %c0_i32 = arith.constant 0 : i32
    %c0_i32_0 = arith.constant 0 : i32
    return %arg0, %c0_i32 : i32, i32
  }
}

</mosaic_0001>

<llo_original>
// kernel: tpu_custom_call.1
$region0: #{tpu_custom_call.1}
  #allocation0 [shape = 'u32[]', space=smem, size = 0x4, offset = 0x4, fixed_abs, tag = 'smem constant byte address 0x4 - core index']
  #allocation1 [shape = 'u32[72,128]{1,0:T(1,128)}', space=vmem, size = 0x9000, scoped, tag = 'internal scratch']
  %s0 = inlined_call_operand.vmem [shape: f32[2,128], index: 0, kind: input, shape index: {}]
  %s1 = inlined_call_operand.vmem [shape: f32[1,128], index: 1, kind: input, shape index: {}]
  %s2 = inlined_call_operand.vmem [shape: f32[128,8], index: 2, kind: input, shape index: {}]
  %s3 = inlined_call_operand.vmem [shape: s32[2,4], index: 3, kind: input, shape index: {}]
  %s4 = inlined_call_operand.hbm [shape: f32[1,1], index: 4, kind: output, shape index: {}]
  %s5 = sld [smem:[#allocation0]]
  $region38: #{tpu_custom_call.1} parent=0
    _
  %s7 = ssub.s32 1, %s5
  %s8 = scalar_select 0, %s7, %s5
  $region1: #{tpu_custom_call.1} parent=0
    #allocation2 [shape = 'u8[512]{0}', space=smem, size = 0x200, scoped, tag = 'output window, operand 0, single buffered']
    #allocation3 [shape = 's32[1]{0}', space=sflag, size = 0x4, scoped, tag = 'scoped memory for tpu_custom_call.1']
    %9 = vsyncpa [#allocation3], 0
    // Predicated region
    $region2: #{tpu_custom_call.1} parent=1 // pred_check
      _
    $region3: #{tpu_custom_call.1} parent=1 // pred_check_branch
      %11 = sbr.rel (0) target = $region5
    $region4: #{tpu_custom_call.1} parent=1 // pred_region
      %s12 = sadd.s32 0, 0
      %p13 = scmp.lt.s32.totalorder %s12, 0
      %s14 = scalar_select %p13, %s12, 0
      %p15 = scmp.lt.s32.totalorder %s14, 0
      %s16 = scalar_select %p15, %s14, 0
      %s17 = smul.addr %s16, 2
      %s18 = scalar_lea.vmem %s0, %s17
      %s19 = sadd.s32 0, 0
      %p20 = scmp.lt.s32.totalorder %s19, 0
      %s21 = scalar_select %p20, %s19, 0
    $region5: #{tpu_custom_call.1} parent=1 // pred_fallthru
      _
    // Predicated region
    $region6: #{tpu_custom_call.1} parent=1 // pred_check
      _
    $region7: #{tpu_custom_call.1} parent=1 // pred_check_branch
      %23 = sbr.rel (0) target = $region9
    $region8: #{tpu_custom_call.1} parent=1 // pred_region
      _
    $region9: #{tpu_custom_call.1} parent=1 // pred_fallthru
      _
    // Predicated region
    $region10: #{tpu_custom_call.1} parent=1 // pred_check
      _
    $region11: #{tpu_custom_call.1} parent=1 // pred_check_branch
      %25 = sbr.rel (0) target = $region13
    $region12: #{tpu_custom_call.1} parent=1 // pred_region
      _
    $region13: #{tpu_custom_call.1} parent=1 // pred_fallthru
      _
    // Predicated region
    $region14: #{tpu_custom_call.1} parent=1 // pred_check
      _
    $region15: #{tpu_custom_call.1} parent=1 // pred_check_branch
      %27 = sbr.rel (0) target = $region17
    $region16: #{tpu_custom_call.1} parent=1 // pred_region
      %s28 = sadd.s32 0, 0
      %p29 = scmp.lt.s32.totalorder %s28, 0
      %s30 = scalar_select %p29, %s28, 0
      %p31 = scmp.lt.s32.totalorder %s30, 0
      %s32 = scalar_select %p31, %s30, 0
      %s33 = smul.addr %s32, 2
      %s34 = scalar_lea.vmem %s3, %s33
      %s35 = sadd.s32 0, 0
      %p36 = scmp.lt.s32.totalorder %s35, 0
      %s37 = scalar_select %p36, %s35, 0
    $region17: #{tpu_custom_call.1} parent=1 // pred_fallthru
      _
    %s38 = sadd.s32 0, 0
    %p39 = scmp.lt.s32.totalorder %s38, 0
    %s40 = scalar_select %p39, %s38, 0
    %p41 = scmp.lt.s32.totalorder %s40, 0
    %s42 = scalar_select %p41, %s40, 0
    %s43 = smul.addr %s42, 2
    %s44 = scalar_lea.vmem %s0, %s43
    %s45 = sadd.s32 0, 0
    %p46 = scmp.lt.s32.totalorder %s45, 0
    %s47 = scalar_select %p46, %s45, 0
    %p48 = scmp.lt.s32.totalorder %s47, 0
    %s49 = scalar_select %p48, %s47, 0
    %s50 = smul.addr %s49, 2
    %s51 = scalar_lea.vmem %s3, %s50
    %s52 = sadd.s32 0, 0
    %p53 = scmp.lt.s32.totalorder %s52, 0
    %s54 = scalar_select %p53, %s52, 0
    %p55 = scmp.lt.s32.totalorder %s54, 0
    %s56 = scalar_select %p55, %s54, 0
    %s57 = smul.addr %s56, 2
    %s58 = scalar_lea.vmem %s0, %s57
    %s59 = sadd.s32 0, 0
    %p60 = scmp.lt.s32.totalorder %s59, 0
    %s61 = scalar_select %p60, %s59, 0
    %s62 = sadd.s32 0, 0
    %p63 = scmp.lt.s32.totalorder %s62, 0
    %s64 = scalar_select %p63, %s62, 0
    %p65 = scmp.lt.s32.totalorder %s64, 0
    %s66 = scalar_select %p65, %s64, 0
    %s67 = smul.addr %s66, 2
    %s68 = scalar_lea.vmem %s3, %s67
    %s69 = sadd.s32 0, 0
    %p70 = scmp.lt.s32.totalorder %s69, 0
    %s71 = scalar_select %p70, %s69, 0
    %p72 = scmp.eq.s32.totalorder 0, 0
    // Predicated region
    $region18: #{tpu_custom_call.1} parent=1 // pred_check
      %p73 = pneg %p72
    $region19: #{tpu_custom_call.1} parent=1 // pred_check_branch
      %75 = sbr.rel (%p73) target = $region21
    $region20: #{tpu_custom_call.1} parent=1 // pred_region
      %s76 = scalar_lea.smem [#allocation2], 0
      %77 = sst [smem:[%s76]] 0.0
    $region21: #{tpu_custom_call.1} parent=1 // pred_fallthru
      _
    %v78 = vld [vmem:[%s58] sm:$0x3]
    %v79 = vld [vmem:[%s1] sm:$0x1]
    %v80 = vld [vmem:[%s68] sm:$0x3]
    %v82 = vperm.slane %v79, 0
    %v84 = vsub.f32 %v82, %v78
    %v85 = vmul.f32 %v84, %v84
    %v86 = vld [vmem:[%s2] sm:$0xff]
    %v87 = vld [vmem:[%s2 + $0x8] sm:$0xff]
    %v88 = vld [vmem:[%s2 + $0x10] sm:$0xff]
    %v89 = vld [vmem:[%s2 + $0x18] sm:$0xff]
    %v90 = vld [vmem:[%s2 + $0x20] sm:$0xff]
    %v91 = vld [vmem:[%s2 + $0x28] sm:$0xff]
    %v92 = vld [vmem:[%s2 + $0x30] sm:$0xff]
    %v93 = vld [vmem:[%s2 + $0x38] sm:$0xff]
    %v94 = vld [vmem:[%s2 + $0x40] sm:$0xff]
    %v95 = vld [vmem:[%s2 + $0x48] sm:$0xff]
    %v96 = vld [vmem:[%s2 + $0x50] sm:$0xff]
    %v97 = vld [vmem:[%s2 + $0x58] sm:$0xff]
    %v98 = vld [vmem:[%s2 + $0x60] sm:$0xff]
    %v99 = vld [vmem:[%s2 + $0x68] sm:$0xff]
    %v100 = vld [vmem:[%s2 + $0x70] sm:$0xff]
    %v101 = vld [vmem:[%s2 + $0x78] sm:$0xff]
    %v102 = vand.u32 %v101, 4294901760
    %103 = vmatpush.msra.mxu0 %v102
    %v104 = vand.u32 %v100, 4294901760
    %105 = vmatpush.msra.mxu0 %v104
    %v106 = vand.u32 %v99, 4294901760
    %107 = vmatpush.msra.mxu0 %v106
    %v108 = vand.u32 %v98, 4294901760
    %109 = vmatpush.msra.mxu0 %v108
    %v110 = vand.u32 %v97, 4294901760
    %111 = vmatpush.msra.mxu0 %v110
    %v112 = vand.u32 %v96, 4294901760
    %113 = vmatpush.msra.mxu0 %v112
    %v114 = vand.u32 %v95, 4294901760
    %115 = vmatpush.msra.mxu0 %v114
    %v116 = vand.u32 %v94, 4294901760
    %117 = vmatpush.msra.mxu0 %v116
    %v118 = vand.u32 %v93, 4294901760
    %119 = vmatpush.msra.mxu0 %v118
    %v120 = vand.u32 %v92, 4294901760
    %121 = vmatpush.msra.mxu0 %v120
    %v122 = vand.u32 %v91, 4294901760
    %123 = vmatpush.msra.mxu0 %v122
    %v124 = vand.u32 %v90, 4294901760
    %125 = vmatpush.msra.mxu0 %v124
    %v126 = vand.u32 %v89, 4294901760
    %127 = vmatpush.msra.mxu0 %v126
    %v128 = vand.u32 %v88, 4294901760
    %129 = vmatpush.msra.mxu0 %v128
    %v130 = vand.u32 %v87, 4294901760
    %131 = vmatpush.msra.mxu0 %v130
    %v132 = vand.u32 %v86, 4294901760
    %133 = vmatpush.msra.mxu0 %v132
    %v134 = vand.u32 %v85, 4294901760
    %v135 = vsub.f32 %v85, %v134
    %v136 = vand.u32 %v135, 4294901760
    %v137 = vsub.f32 %v135, %v136
    %v138 = vand.u32 %v137, 4294901760
    %139 = vmatmul.f32.gmra.mxu0 %v138
    %v140 = vpop.f32.mrf.mxu0
    %v141 = vadd.f32 0.0, %v140
    %142 = vdwg.mxu0
    %v143 = vand.u32 %v101, 4294901760
    %v144 = vsub.f32 %v101, %v143
    %v145 = vand.u32 %v144, 4294901760
    %v146 = vsub.f32 %v144, %v145
    %v147 = vand.u32 %v146, 4294901760
    %148 = vmatpush.msra.mxu0 %v147
    %v149 = vand.u32 %v100, 4294901760
    %v150 = vsub.f32 %v100, %v149
    %v151 = vand.u32 %v150, 4294901760
    %v152 = vsub.f32 %v150, %v151
    %v153 = vand.u32 %v152, 4294901760
    %154 = vmatpush.msra.mxu0 %v153
    %v155 = vand.u32 %v99, 4294901760
    %v156 = vsub.f32 %v99, %v155
    %v157 = vand.u32 %v156, 4294901760
    %v158 = vsub.f32 %v156, %v157
    %v159 = vand.u32 %v158, 4294901760
    %160 = vmatpush.msra.mxu0 %v159
    %v161 = vand.u32 %v98, 4294901760
    %v162 = vsub.f32 %v98, %v161
    %v163 = vand.u32 %v162, 4294901760
    %v164 = vsub.f32 %v162, %v163
    %v165 = vand.u32 %v164, 4294901760
    %166 = vmatpush.msra.mxu0 %v165
    %v167 = vand.u32 %v97, 4294901760
    %v168 = vsub.f32 %v97, %v167
    %v169 = vand.u32 %v168, 4294901760
    %v170 = vsub.f32 %v168, %v169
    %v171 = vand.u32 %v170, 4294901760
    %172 = vmatpush.msra.mxu0 %v171
    %v173 = vand.u32 %v96, 4294901760
    %v174 = vsub.f32 %v96, %v173
    %v175 = vand.u32 %v174, 4294901760
    %v176 = vsub.f32 %v174, %v175
    %v177 = vand.u32 %v176, 4294901760
    %178 = vmatpush.msra.mxu0 %v177
    %v179 = vand.u32 %v95, 4294901760
    %v180 = vsub.f32 %v95, %v179
    %v181 = vand.u32 %v180, 4294901760
    %v182 = vsub.f32 %v180, %v181
    %v183 = vand.u32 %v182, 4294901760
    %184 = vmatpush.msra.mxu0 %v183
    %v185 = vand.u32 %v94, 4294901760
    %v186 = vsub.f32 %v94, %v185
    %v187 = vand.u32 %v186, 4294901760
    %v188 = vsub.f32 %v186, %v187
    %v189 = vand.u32 %v188, 4294901760
    %190 = vmatpush.msra.mxu0 %v189
    %v191 = vand.u32 %v93, 4294901760
    %v192 = vsub.f32 %v93, %v191
    %v193 = vand.u32 %v192, 4294901760
    %v194 = vsub.f32 %v192, %v193
    %v195 = vand.u32 %v194, 4294901760
    %196 = vmatpush.msra.mxu0 %v195
    %v197 = vand.u32 %v92, 4294901760
    %v198 = vsub.f32 %v92, %v197
    %v199 = vand.u32 %v198, 4294901760
    %v200 = vsub.f32 %v198, %v199
    %v201 = vand.u32 %v200, 4294901760
    %202 = vmatpush.msra.mxu0 %v201
    %v203 = vand.u32 %v91, 4294901760
    %v204 = vsub.f32 %v91, %v203
    %v205 = vand.u32 %v204, 4294901760
    %v206 = vsub.f32 %v204, %v205
    %v207 = vand.u32 %v206, 4294901760
    %208 = vmatpush.msra.mxu0 %v207
    %v209 = vand.u32 %v90, 4294901760
    %v210 = vsub.f32 %v90, %v209
    %v211 = vand.u32 %v210, 4294901760
    %v212 = vsub.f32 %v210, %v211
    %v213 = vand.u32 %v212, 4294901760
    %214 = vmatpush.msra.mxu0 %v213
    %v215 = vand.u32 %v89, 4294901760
    %v216 = vsub.f32 %v89, %v215
    %v217 = vand.u32 %v216, 4294901760
    %v218 = vsub.f32 %v216, %v217
    %v219 = vand.u32 %v218, 4294901760
    %220 = vmatpush.msra.mxu0 %v219
    %v221 = vand.u32 %v88, 4294901760
    %v222 = vsub.f32 %v88, %v221
    %v223 = vand.u32 %v222, 4294901760
    %v224 = vsub.f32 %v222, %v223
    %v225 = vand.u32 %v224, 4294901760
    %226 = vmatpush.msra.mxu0 %v225
    %v227 = vand.u32 %v87, 4294901760
    %v228 = vsub.f32 %v87, %v227
    %v229 = vand.u32 %v228, 4294901760
    %v230 = vsub.f32 %v228, %v229
    %v231 = vand.u32 %v230, 4294901760
    %232 = vmatpush.msra.mxu0 %v231
    %v233 = vand.u32 %v86, 4294901760
    %v234 = vsub.f32 %v86, %v233
    %v235 = vand.u32 %v234, 4294901760
    %v236 = vsub.f32 %v234, %v235
    %v237 = vand.u32 %v236, 4294901760
    %238 = vmatpush.msra.mxu0 %v237
    %v239 = vand.u32 %v85, 4294901760
    %240 = vmatmul.f32.gmra.mxu0 %v239
    %v241 = vpop.f32.mrf.mxu0
    %v242 = vadd.f32 %v141, %v241
    %243 = vdwg.mxu0
    %v244 = vand.u32 %v101, 4294901760
    %v245 = vsub.f32 %v101, %v244
    %246 = vmatpush.msra.mxu0 %v245
    %v247 = vand.u32 %v100, 4294901760
    %v248 = vsub.f32 %v100, %v247
    %249 = vmatpush.msra.mxu0 %v248
    %v250 = vand.u32 %v99, 4294901760
    %v251 = vsub.f32 %v99, %v250
    %252 = vmatpush.msra.mxu0 %v251
    %v253 = vand.u32 %v98, 4294901760
    %v254 = vsub.f32 %v98, %v253
    %255 = vmatpush.msra.mxu0 %v254
    %v256 = vand.u32 %v97, 4294901760
    %v257 = vsub.f32 %v97, %v256
    %258 = vmatpush.msra.mxu0 %v257
    %v259 = vand.u32 %v96, 4294901760
    %v260 = vsub.f32 %v96, %v259
    %261 = vmatpush.msra.mxu0 %v260
    %v262 = vand.u32 %v95, 4294901760
    %v263 = vsub.f32 %v95, %v262
    %264 = vmatpush.msra.mxu0 %v263
    %v265 = vand.u32 %v94, 4294901760
    %v266 = vsub.f32 %v94, %v265
    %267 = vmatpush.msra.mxu0 %v266
    %v268 = vand.u32 %v93, 4294901760
    %v269 = vsub.f32 %v93, %v268
    %270 = vmatpush.msra.mxu0 %v269
    %v271 = vand.u32 %v92, 4294901760
    %v272 = vsub.f32 %v92, %v271
    %273 = vmatpush.msra.mxu0 %v272
    %v274 = vand.u32 %v91, 4294901760
    %v275 = vsub.f32 %v91, %v274
    %276 = vmatpush.msra.mxu0 %v275
    %v277 = vand.u32 %v90, 4294901760
    %v278 = vsub.f32 %v90, %v277
    %279 = vmatpush.msra.mxu0 %v278
    %v280 = vand.u32 %v89, 4294901760
    %v281 = vsub.f32 %v89, %v280
    %282 = vmatpush.msra.mxu0 %v281
    %v283 = vand.u32 %v88, 4294901760
    %v284 = vsub.f32 %v88, %v283
    %285 = vmatpush.msra.mxu0 %v284
    %v286 = vand.u32 %v87, 4294901760
    %v287 = vsub.f32 %v87, %v286
    %288 = vmatpush.msra.mxu0 %v287
    %v289 = vand.u32 %v86, 4294901760
    %v290 = vsub.f32 %v86, %v289
    %291 = vmatpush.msra.mxu0 %v290
    %v292 = vand.u32 %v85, 4294901760
    %v293 = vsub.f32 %v85, %v292
    %294 = vmatmul.f32.gmra.mxu0 %v293
    %v295 = vpop.f32.mrf.mxu0
    %v296 = vadd.f32 %v242, %v295
    %297 = vdwg.mxu0
    %v298 = vand.u32 %v101, 4294901760
    %299 = vmatpush.msra.mxu0 %v298
    %v300 = vand.u32 %v100, 4294901760
    %301 = vmatpush.msra.mxu0 %v300
    %v302 = vand.u32 %v99, 4294901760
    %303 = vmatpush.msra.mxu0 %v302
    %v304 = vand.u32 %v98, 4294901760
    %305 = vmatpush.msra.mxu0 %v304
    %v306 = vand.u32 %v97, 4294901760
    %307 = vmatpush.msra.mxu0 %v306
    %v308 = vand.u32 %v96, 4294901760
    %309 = vmatpush.msra.mxu0 %v308
    %v310 = vand.u32 %v95, 4294901760
    %311 = vmatpush.msra.mxu0 %v310
    %v312 = vand.u32 %v94, 4294901760
    %313 = vmatpush.msra.mxu0 %v312
    %v314 = vand.u32 %v93, 4294901760
    %315 = vmatpush.msra.mxu0 %v314
    %v316 = vand.u32 %v92, 4294901760
    %317 = vmatpush.msra.mxu0 %v316
    %v318 = vand.u32 %v91, 4294901760
    %319 = vmatpush.msra.mxu0 %v318
    %v320 = vand.u32 %v90, 4294901760
    %321 = vmatpush.msra.mxu0 %v320
    %v322 = vand.u32 %v89, 4294901760
    %323 = vmatpush.msra.mxu0 %v322
    %v324 = vand.u32 %v88, 4294901760
    %325 = vmatpush.msra.mxu0 %v324
    %v326 = vand.u32 %v87, 4294901760
    %327 = vmatpush.msra.mxu0 %v326
    %v328 = vand.u32 %v86, 4294901760
    %329 = vmatpush.msra.mxu0 %v328
    %v330 = vand.u32 %v85, 4294901760
    %v331 = vsub.f32 %v85, %v330
    %v332 = vand.u32 %v331, 4294901760
    %333 = vmatmul.f32.gmra.mxu0 %v332
    %v334 = vpop.f32.mrf.mxu0
    %v335 = vadd.f32 %v296, %v334
    %336 = vdwg.mxu0
    %v337 = vand.u32 %v101, 4294901760
    %v338 = vsub.f32 %v101, %v337
    %v339 = vand.u32 %v338, 4294901760
    %340 = vmatpush.msra.mxu0 %v339
    %v341 = vand.u32 %v100, 4294901760
    %v342 = vsub.f32 %v100, %v341
    %v343 = vand.u32 %v342, 4294901760
    %344 = vmatpush.msra.mxu0 %v343
    %v345 = vand.u32 %v99, 4294901760
    %v346 = vsub.f32 %v99, %v345
    %v347 = vand.u32 %v346, 4294901760
    %348 = vmatpush.msra.mxu0 %v347
    %v349 = vand.u32 %v98, 4294901760
    %v350 = vsub.f32 %v98, %v349
    %v351 = vand.u32 %v350, 4294901760
    %352 = vmatpush.msra.mxu0 %v351
    %v353 = vand.u32 %v97, 4294901760
    %v354 = vsub.f32 %v97, %v353
    %v355 = vand.u32 %v354, 4294901760
    %356 = vmatpush.msra.mxu0 %v355
    %v357 = vand.u32 %v96, 4294901760
    %v358 = vsub.f32 %v96, %v357
    %v359 = vand.u32 %v358, 4294901760
    %360 = vmatpush.msra.mxu0 %v359
    %v361 = vand.u32 %v95, 4294901760
    %v362 = vsub.f32 %v95, %v361
    %v363 = vand.u32 %v362, 4294901760
    %364 = vmatpush.msra.mxu0 %v363
    %v365 = vand.u32 %v94, 4294901760
    %v366 = vsub.f32 %v94, %v365
    %v367 = vand.u32 %v366, 4294901760
    %368 = vmatpush.msra.mxu0 %v367
    %v369 = vand.u32 %v93, 4294901760
    %v370 = vsub.f32 %v93, %v369
    %v371 = vand.u32 %v370, 4294901760
    %372 = vmatpush.msra.mxu0 %v371
    %v373 = vand.u32 %v92, 4294901760
    %v374 = vsub.f32 %v92, %v373
    %v375 = vand.u32 %v374, 4294901760
    %376 = vmatpush.msra.mxu0 %v375
    %v377 = vand.u32 %v91, 4294901760
    %v378 = vsub.f32 %v91, %v377
    %v379 = vand.u32 %v378, 4294901760
    %380 = vmatpush.msra.mxu0 %v379
    %v381 = vand.u32 %v90, 4294901760
    %v382 = vsub.f32 %v90, %v381
    %v383 = vand.u32 %v382, 4294901760
    %384 = vmatpush.msra.mxu0 %v383
    %v385 = vand.u32 %v89, 4294901760
    %v386 = vsub.f32 %v89, %v385
    %v387 = vand.u32 %v386, 4294901760
    %388 = vmatpush.msra.mxu0 %v387
    %v389 = vand.u32 %v88, 4294901760
    %v390 = vsub.f32 %v88, %v389
    %v391 = vand.u32 %v390, 4294901760
    %392 = vmatpush.msra.mxu0 %v391
    %v393 = vand.u32 %v87, 4294901760
    %v394 = vsub.f32 %v87, %v393
    %v395 = vand.u32 %v394, 4294901760
    %396 = vmatpush.msra.mxu0 %v395
    %v397 = vand.u32 %v86, 4294901760
    %v398 = vsub.f32 %v86, %v397
    %v399 = vand.u32 %v398, 4294901760
    %400 = vmatpush.msra.mxu0 %v399
    %v401 = vand.u32 %v85, 4294901760
    %402 = vmatmul.f32.gmra.mxu0 %v401
    %v403 = vpop.f32.mrf.mxu0
    %v404 = vadd.f32 %v335, %v403
    %405 = vdwg.mxu0
    %v406 = vand.u32 %v101, 4294901760
    %407 = vmatpush.msra.mxu0 %v406
    %v408 = vand.u32 %v100, 4294901760
    %409 = vmatpush.msra.mxu0 %v408
    %v410 = vand.u32 %v99, 4294901760
    %411 = vmatpush.msra.mxu0 %v410
    %v412 = vand.u32 %v98, 4294901760
    %413 = vmatpush.msra.mxu0 %v412
    %v414 = vand.u32 %v97, 4294901760
    %415 = vmatpush.msra.mxu0 %v414
    %v416 = vand.u32 %v96, 4294901760
    %417 = vmatpush.msra.mxu0 %v416
    %v418 = vand.u32 %v95, 4294901760
    %419 = vmatpush.msra.mxu0 %v418
    %v420 = vand.u32 %v94, 4294901760
    %421 = vmatpush.msra.mxu0 %v420
    %v422 = vand.u32 %v93, 4294901760
    %423 = vmatpush.msra.mxu0 %v422
    %v424 = vand.u32 %v92, 4294901760
    %425 = vmatpush.msra.mxu0 %v424
    %v426 = vand.u32 %v91, 4294901760
    %427 = vmatpush.msra.mxu0 %v426
    %v428 = vand.u32 %v90, 4294901760
    %429 = vmatpush.msra.mxu0 %v428
    %v430 = vand.u32 %v89, 4294901760
    %431 = vmatpush.msra.mxu0 %v430
    %v432 = vand.u32 %v88, 4294901760
    %433 = vmatpush.msra.mxu0 %v432
    %v434 = vand.u32 %v87, 4294901760
    %435 = vmatpush.msra.mxu0 %v434
    %v436 = vand.u32 %v86, 4294901760
    %437 = vmatpush.msra.mxu0 %v436
    %v438 = vand.u32 %v85, 4294901760
    %439 = vmatmul.f32.gmra.mxu0 %v438
    %v440 = vpop.f32.mrf.mxu0
    %v441 = vadd.f32 %v404, %v440
    %442 = vdwg.mxu0
    %vm443 = vcmp.ne.s32.totalorder %v80, 0
    %v444 = vsel %vm443, 1e-06, 0.0
    %v445 = vadd.f32 %v441, %v444
    %v446 = vrcp.pop %v445
    %vm447 = vcmp.lt.s32.totalorder %v80, 0
    %v448 = vsel %vm447, %v446, %v445
    %v449 = vsel %vm443, 1.5, 1.0
    %v450 = vmul.f32 %v449, %v448
    %s451 = sadd.s32 0, 0
    %s452 = smul.u32 %s451, 2
    %s453 = sadd.s32 %s452, 2
    %p454 = scmp.gt.s32.totalorder %s453, 2
    // Predicated region
    $region22: #{tpu_custom_call.1} parent=1 // pred_check
      %p455 = pneg %p454
    $region23: #{tpu_custom_call.1} parent=1 // pred_check_branch
      %457 = sbr.rel (%p455) target = $region25
    $region24: #{tpu_custom_call.1} parent=1 // pred_region
      %v458 = vlaneseq
      %v459 = vshrl.u32 %v458, 7
      %v460 = vstv %s452
      %v461 = vadd.s32 %v460, %v459
      %s462 = sld [smem:[#allocation2]]
      %vm463 = vcmp.lt.s32.totalorder %v461, 2
      %v464 = vsel %vm463, %v450, 0.0
      %vm465 = vcmask 25600
      %v466 = vsel %vm465, %v464, 0.0
      %467 = vadd.xlane.f32.xlu0 %v466
      %v468 = vpop.xlane.xlu0 %467
      %v469 = vrot.slane %v468, 4
      %v470 = vadd.f32 %v468, %v469
      %v471 = vrot.slane %v470, 2
      %v472 = vadd.f32 %v470, %v471
      %v473 = vrot.slane %v472, 1
      %v474 = vadd.f32 %v472, %v473
      %s475 = vtos %v474
      %s476 = sadd.f32 %s462, %s475
      %s477 = scalar_lea.smem [#allocation2], 0
      %478 = sst [smem:[%s477]] %s476
    $region25: #{tpu_custom_call.1} parent=1 // pred_fallthru
      _
    %p479 = scmp.le.s32.totalorder %s453, 2
    // Predicated region
    $region26: #{tpu_custom_call.1} parent=1 // pred_check
      %p480 = pneg %p479
    $region27: #{tpu_custom_call.1} parent=1 // pred_check_branch
      %482 = sbr.rel (%p480) target = $region29
    $region28: #{tpu_custom_call.1} parent=1 // pred_region
      %s483 = sld [smem:[#allocation2]]
      %vm484 = vcmask 25600
      %v485 = vsel %vm484, %v450, 0.0
      %486 = vadd.xlane.f32.xlu0 %v485
      %v487 = vpop.xlane.xlu0 %486
      %v488 = vrot.slane %v487, 4
      %v489 = vadd.f32 %v487, %v488
      %v490 = vrot.slane %v489, 2
      %v491 = vadd.f32 %v489, %v490
      %v492 = vrot.slane %v491, 1
      %v493 = vadd.f32 %v491, %v492
      %s494 = vtos %v493
      %s495 = sadd.f32 %s483, %s494
      %s496 = scalar_lea.smem [#allocation2], 0
      %497 = sst [smem:[%s496]] %s495
    $region29: #{tpu_custom_call.1} parent=1 // pred_fallthru
      _
    // Predicated region
    $region30: #{tpu_custom_call.1} parent=1 // pred_check
      _
    $region31: #{tpu_custom_call.1} parent=1 // pred_check_branch
      %499 = sbr.rel (0) target = $region33
    $region32: #{tpu_custom_call.1} parent=1 // pred_region
      %501 = vsyncadd [#allocation3], 0
      %s503 = sshll.u32 %s4, 4
      %s504 = int_to_ptr.hbm [resolvable:$true] %s503
      %506 = dma.smem_to_hbm [#allocation2], 16, %s504, [#allocation3]
    $region33: #{tpu_custom_call.1} parent=1 // pred_fallthru
      _
    // Predicated region
    $region34: #{tpu_custom_call.1} parent=1 // pred_check
      _
    $region35: #{tpu_custom_call.1} parent=1 // pred_check_branch
      %508 = sbr.rel (0) target = $region37
    $region36: #{tpu_custom_call.1} parent=1 // pred_region
      %510 = dma.done [#allocation3], 16
    $region37: #{tpu_custom_call.1} parent=1 // pred_fallthru
      _
    %511 = sfence
    %512 = vsyncpa [#allocation3], 1

</llo_original>
